<compile_context>
chip_gen: v7x
topology: tpu7x:2x2x1
jax: 0.10.0
libtpu: 0.0.40
codegen_flags: <defaults>
</compile_context>

<pallas_src>
import functools

import jax
import jax.numpy as jnp
from jax import lax
from jax.experimental import pallas as pl
from jax.experimental.pallas import tpu as pltpu


# VMEM budget for the double-buffered x tile + the two f32 scratch accumulators.
# Kept small enough for every generation (v7x: 64 MiB physical / 32 MiB scoped
# default); at C >= 8 this still yields >= 512-lane tiles, ~85% of HBM roofline.
_POOL_TILE_BYTES = 16 << 20


def _layernorm(z, gamma, beta, eps=1e-5):
    mu = jnp.mean(z, axis=-1, keepdims=True)
    var = jnp.mean((z - mu) ** 2, axis=-1, keepdims=True)
    return (z - mu) * lax.rsqrt(var + eps) * gamma + beta


# ---------------------------------------------------------------------------
# Kernel 1: tiled global max / avg pooling over the flattened spatial axis.
# ---------------------------------------------------------------------------
def _pool_kernel(x_ref,                 # (1, C, tS) tile of x
                 max_ref, avg_ref,      # (1, 1, C) outputs
                 max_acc, sum_acc,      # (1, C, tS) f32 VMEM scratch
                 *, s_total, tile_s, mask_tail):
    k = pl.program_id(1)
    n_k = pl.num_programs(1)

    @pl.when(k == 0)
    def _init():
        max_acc[...] = jnp.full_like(max_acc, -jnp.inf)
        sum_acc[...] = jnp.zeros_like(sum_acc)

    tile = x_ref[...].astype(jnp.float32)            # (1, C, tS)

    if mask_tail:                                    # static: only when S % tS != 0
        is_tail = k == n_k - 1

        # Interior tiles: pure VPU max/add, no iota / select on the hot path.
        @pl.when(jnp.logical_not(is_tail))
        def _interior():
            max_acc[...] = jnp.maximum(max_acc[...], tile)
            sum_acc[...] = sum_acc[...] + tile

        # Last (partial) tile only: mask out the OOB lanes.
        @pl.when(is_tail)
        def _tail():
            lane = lax.broadcasted_iota(jnp.int32, tile.shape, 2)
            valid = (k * tile_s + lane) < s_total
            max_acc[...] = jnp.maximum(max_acc[...],
                                       jnp.where(valid, tile, -jnp.inf))
            sum_acc[...] = sum_acc[...] + jnp.where(valid, tile, 0.0)
    else:
        # Elementwise (VPU-only) accumulation; cross-lane reduce in epilogue.
        max_acc[...] = jnp.maximum(max_acc[...], tile)
        sum_acc[...] = sum_acc[...] + tile

    @pl.when(k == n_k - 1)
    def _finalize():
        mx = jnp.max(max_acc[...], axis=-1)                       # (1, C)
        av = jnp.sum(sum_acc[...], axis=-1) * (1.0 / s_total)     # (1, C)
        max_ref[...] = mx[:, None, :]
        avg_ref[...] = av[:, None, :]


def _choose_pool_tile(S, C, itemsize, tile_bytes):
    # Bytes per lane column resident in VMEM: 2 pipeline buffers of the x tile
    # plus the two f32 accumulators.
    per_lane = C * (2 * itemsize + 2 * 4)
    cap = max(128, (tile_bytes // per_lane) // 128 * 128)
    if S <= cap:
        return S, 1, False, per_lane
    n_tiles = pl.cdiv(S, cap)
    return cap, n_tiles, (S % cap) != 0, per_lane


def _global_pool(x3, *, tile_bytes=_POOL_TILE_BYTES):
    """x3: (N, C, S) -> (max, avg), each (N, C) float32."""
    N, C, S = x3.shape
    itemsize = jnp.dtype(x3.dtype).itemsize
    tile_s, n_tiles, mask_tail, per_lane = _choose_pool_tile(S, C, itemsize, tile_bytes)
    # Explicit scoped-VMEM limit sized from the resident buffers (+ slack for
    # outputs / compiler internals); stays well under v7x's 64 MiB.
    vmem_limit = int(per_lane * tile_s + (8 << 20))

    kernel = functools.partial(
        _pool_kernel, s_total=S, tile_s=tile_s, mask_tail=mask_tail)

    mx3, av3 = pl.pallas_call(
        kernel,
        out_shape=(jax.ShapeDtypeStruct((N, 1, C), jnp.float32),
                   jax.ShapeDtypeStruct((N, 1, C), jnp.float32)),
        grid=(N, n_tiles),
        in_specs=[pl.BlockSpec((1, C, tile_s), lambda n, k: (n, 0, k))],
        out_specs=(pl.BlockSpec((1, 1, C), lambda n, k: (n, 0, 0)),
                   pl.BlockSpec((1, 1, C), lambda n, k: (n, 0, 0))),
        scratch_shapes=[pltpu.VMEM((1, C, tile_s), jnp.float32),
                        pltpu.VMEM((1, C, tile_s), jnp.float32)],
        compiler_params=pltpu.CompilerParams(
            dimension_semantics=("parallel", "arbitrary"),
            vmem_limit_bytes=vmem_limit),
    )(x3)
    return mx3.reshape(N, C), av3.reshape(N, C)


# ---------------------------------------------------------------------------
# Kernel 2: tiny transformer-encoder epilogue on the pooled (N, C) features.
# ---------------------------------------------------------------------------
def _chatt_encoder_kernel(pooled_ref,                 # (N, 2C)  [max | avg]
                          conv_w_ref, conv_b_ref,     # (2C, C), (1, C)
                          wqkv_ref, bqkv_ref,         # (C, 3C), (1, 3C)
                          wo_ref, bo_ref,             # (C, C),  (1, C)
                          w1_ref, b1_ref,             # (C, dff), (1, dff)
                          w2_ref, b2_ref,             # (dff, C), (1, C)
                          g1_ref, be1_ref,            # (1, C) layernorm 1
                          g2_ref, be2_ref,            # (1, C) layernorm 2
                          out_ref,                    # (N, C)
                          *, num_heads):
    N, C = out_ref.shape
    hd = C // num_heads
    scale = 1.0 / float(hd) ** 0.5

    # ---- Conv3d(2C -> C, kernel 1): one fused matmul on [max | avg] ----
    t = (jnp.dot(pooled_ref[...], conv_w_ref[...],
                 preferred_element_type=jnp.float32) + conv_b_ref[...])     # (N, C)

    # ---- fused QKV projection: single (N, C) x (C, 3C) matmul ----
    qkv = (jnp.dot(t, wqkv_ref[...], preferred_element_type=jnp.float32)
           + bqkv_ref[...])                                                 # (N, 3C)
    q = qkv[:, 0 * C:1 * C] * scale
    k = qkv[:, 1 * C:2 * C]
    v = qkv[:, 2 * C:3 * C]
    kt = k.T                                  # one transpose shared by all heads

    # ---- multi-head self-attention over the N tokens; heads = static slices ----
    heads = []
    for h in range(num_heads):                # static unrolled loop
        lo, hi = h * hd, (h + 1) * hd
        s = jnp.dot(q[:, lo:hi], kt[lo:hi, :],
                    preferred_element_type=jnp.float32)                     # (N, N)
        s = s - jnp.max(s, axis=-1, keepdims=True)
        p = jnp.exp(s)
        p = p * pl.reciprocal(jnp.sum(p, axis=-1, keepdims=True), approx=True)
        heads.append(jnp.dot(p, v[:, lo:hi],
                             preferred_element_type=jnp.float32))           # (N, hd)
    attn = jnp.concatenate(heads, axis=-1)                                  # (N, C)
    attn = jnp.dot(attn, wo_ref[...], preferred_element_type=jnp.float32) + bo_ref[...]

    # ---- post-norm transformer encoder layer ----
    # TODO(synk): dropout layers of TransformerEncoderLayer are identity (eval mode).
    src = _layernorm(t + attn, g1_ref[...], be1_ref[...])
    hid = jnp.maximum(
        jnp.dot(src, w1_ref[...], preferred_element_type=jnp.float32) + b1_ref[...],
        0.0)
    ff = jnp.dot(hid, w2_ref[...], preferred_element_type=jnp.float32) + b2_ref[...]
    out_ref[...] = _layernorm(src + ff, g2_ref[...], be2_ref[...]).astype(out_ref.dtype)


# ---------------------------------------------------------------------------
# Parameters / forward / pure-JAX reference
# ---------------------------------------------------------------------------
def make_params(key, in_channels):
    """Deterministic synthetic parameters with PyTorch-native shapes."""
    C = in_channels
    dff = max(C // 4, 1)
    ks = jax.random.split(key, 10)

    def rn(k, shape, scale=0.1):
        return scale * jax.random.normal(k, shape, jnp.float32)

    return dict(
        conv_w=rn(ks[0], (C, 2 * C)),       # Conv3d weight (C, 2C, 1, 1, 1) squeezed
        conv_b=rn(ks[1], (C,)),
        in_proj_w=rn(ks[2], (3 * C, C)),    # MHA packed q/k/v projection
        in_proj_b=rn(ks[3], (3 * C,)),
        out_proj_w=rn(ks[4], (C, C)),
        out_proj_b=rn(ks[5], (C,)),
        lin1_w=rn(ks[6], (dff, C)),
        lin1_b=rn(ks[7], (dff,)),
        lin2_w=rn(ks[8], (C, dff)),
        lin2_b=rn(ks[9], (C,)),
        norm1_w=jnp.ones((C,), jnp.float32),
        norm1_b=jnp.zeros((C,), jnp.float32),
        norm2_w=jnp.ones((C,), jnp.float32),
        norm2_b=jnp.zeros((C,), jnp.float32),
    )


def chatt_forward(x, params, num_heads=8, *, pool_tile_bytes=_POOL_TILE_BYTES):
    """x: (N, C, D, H, W) -> (N, C, 1, 1, 1) float32."""
    N, C, D, H, W = x.shape
    assert C % num_heads == 0, "in_channels must be divisible by nhead"
    S = D * H * W
    # NOTE: the pooling kernel is HBM-bandwidth bound on x; feeding x as
    # bfloat16 halves that traffic (accumulation stays f32 inside the kernel).
    # We do NOT force a cast here since that itself would cost an HBM round trip.
    x3 = x.reshape(N, C, S)

    mx, av = _global_pool(x3, tile_bytes=pool_tile_bytes)
    pooled = jnp.concatenate([mx, av], axis=-1)          # (N, 2C) — tiny

    p = params
    args = (
        pooled,
        p["conv_w"].T, p["conv_b"][None, :],             # fused 1x1x1 conv
        p["in_proj_w"].T, p["in_proj_b"][None, :],       # fused QKV (C, 3C)
        p["out_proj_w"].T, p["out_proj_b"][None, :],
        p["lin1_w"].T, p["lin1_b"][None, :],
        p["lin2_w"].T, p["lin2_b"][None, :],
        p["norm1_w"][None, :], p["norm1_b"][None, :],
        p["norm2_w"][None, :], p["norm2_b"][None, :],
    )

    vmem = pl.BlockSpec(memory_space=pltpu.MemorySpace.VMEM)
    out = pl.pallas_call(
        functools.partial(_chatt_encoder_kernel, num_heads=num_heads),
        out_shape=jax.ShapeDtypeStruct((N, C), jnp.float32),
        in_specs=[vmem] * len(args),
        out_specs=vmem,
    )(*args)
    return out.reshape(N, C, 1, 1, 1)


def chatt_reference(x, params, num_heads=8):
    """Pure-JAX reference mirroring the PyTorch forward (eval mode)."""
    N, C = x.shape[0], x.shape[1]
    xf = x.reshape(N, C, -1).astype(jnp.float32)
    mx = xf.max(-1)
    av = xf.mean(-1)
    pooled = jnp.concatenate([mx, av], axis=-1)
    t = pooled @ params["conv_w"].T + params["conv_b"]

    Wq, Wk, Wv = jnp.split(params["in_proj_w"], 3, axis=0)
    bq, bk, bv = jnp.split(params["in_proj_b"], 3, axis=0)
    q, k, v = t @ Wq.T + bq, t @ Wk.T + bk, t @ Wv.T + bv
    dh = C // num_heads
    qh = q.reshape(N, num_heads, dh).transpose(1, 0, 2)
    kh = k.reshape(N, num_heads, dh).transpose(1, 0, 2)
    vh = v.reshape(N, num_heads, dh).transpose(1, 0, 2)
    s = jnp.einsum("hid,hjd->hij", qh, kh) / jnp.sqrt(float(dh))
    pr = jax.nn.softmax(s, axis=-1)
    o = jnp.einsum("hij,hjd->hid", pr, vh).transpose(1, 0, 2).reshape(N, C)
    o = o @ params["out_proj_w"].T + params["out_proj_b"]

    def ln(z, g, b):
        mu = z.mean(-1, keepdims=True)
        var = ((z - mu) ** 2).mean(-1, keepdims=True)
        return (z - mu) / jnp.sqrt(var + 1e-5) * g + b

    src = ln(t + o, params["norm1_w"], params["norm1_b"])
    ff = (jnp.maximum(src @ params["lin1_w"].T + params["lin1_b"], 0.0)
          @ params["lin2_w"].T + params["lin2_b"])
    src = ln(src + ff, params["norm2_w"], params["norm2_b"])
    return src.reshape(N, C, 1, 1, 1)


if __name__ == "__main__":
    key = jax.random.PRNGKey(0)
    kx, kx2, kp = jax.random.split(key, 3)

    # Small shapes: C must be divisible by nhead=8 and >= 4 (dim_ff = C // 4).
    N, C = 2, 16
    params = make_params(kp, C)

    # Case 1: default tile budget -> single-tile pooling path.
    x = jax.random.normal(kx, (N, C, 4, 8, 8), jnp.float32)
    out = jax.block_until_ready(chatt_forward(x, params))
    assert out.shape == (N, C, 1, 1, 1), out.shape
    ref = chatt_reference(x, params)
    err = float(jnp.max(jnp.abs(out - ref)))
    assert err < 2e-3, f"kernel/reference mismatch (case 1): {err}"

    # Case 2: odd spatial size + tiny tile budget -> multi-tile pooling with
    # a masked (partial) tail tile, exercising the pipelined reduction path
    # and the pl.when-gated tail-mask branch.
    x2 = jax.random.normal(kx2, (N, C, 5, 6, 7), jnp.float32)
    out2 = jax.block_until_ready(
        chatt_forward(x2, params, pool_tile_bytes=32 * 1024))
    ref2 = chatt_reference(x2, params)
    err2 = float(jnp.max(jnp.abs(out2 - ref2)))
    assert err2 < 2e-3, f"kernel/reference mismatch (case 2): {err2}"

    print("KERNEL_OK")
</pallas_src>

<mosaic_0001>
module attributes {stable_mosaic.version = 11 : i64} {
  func.func @_pool_kernel(%arg0: i32, %arg1: i32, %arg2: memref<1x16x256xf32, #tpu.memory_space<vmem>>, %arg3: memref<1x1x16xf32, #tpu.memory_space<vmem>>, %arg4: memref<1x1x16xf32, #tpu.memory_space<vmem>>, %arg5: memref<1x16x256xf32, #tpu.memory_space<vmem>>, %arg6: memref<1x16x256xf32, #tpu.memory_space<vmem>>) attributes {dimension_semantics = [#tpu.dimension_semantics<parallel>, #tpu.dimension_semantics<arbitrary>], iteration_bounds = array<i64: 2, 1>, scalar_prefetch = 0 : i64, scratch_operands = 2 : i64, tpu.core_type = #tpu.core_type<tc>, window_params = [{transform_indices = @transform_0, window_bounds = array<i64: 1, 16, 256>}, {transform_indices = @transform_1, window_bounds = array<i64: 1, 1, 16>}, {transform_indices = @transform_2, window_bounds = array<i64: 1, 1, 16>}]} {
    %c0_i32 = arith.constant 0 : i32
    %0 = arith.cmpi eq, %arg1, %c0_i32 : i32
    %1 = arith.extui %0 : i1 to i32
    %c0_i32_0 = arith.constant 0 : i32
    %2 = arith.cmpi ne, %1, %c0_i32_0 : i32
    scf.if %2 {
      %cst = arith.constant 0xFF800000 : f32
      %13 = vector.broadcast %cst : f32 to vector<1x16x256xf32>
      %c0_17 = arith.constant 0 : index
      %c0_18 = arith.constant 0 : index
      %c0_19 = arith.constant 0 : index
      %14 = vector.load %arg5[%c0_17, %c0_18, %c0_19] : memref<1x16x256xf32, #tpu.memory_space<vmem>>, vector<1x16x256xf32>
      tpu.vector_store %arg5[%c0_17, %c0_18, %c0_19], %13 {strides = array<i32>} : memref<1x16x256xf32, #tpu.memory_space<vmem>>, vector<1x16x256xf32>,
      %cst_20 = arith.constant 0.000000e+00 : f32
      %15 = vector.broadcast %cst_20 : f32 to vector<1x16x256xf32>
      %c0_21 = arith.constant 0 : index
      %c0_22 = arith.constant 0 : index
      %c0_23 = arith.constant 0 : index
      %16 = vector.load %arg6[%c0_21, %c0_22, %c0_23] : memref<1x16x256xf32, #tpu.memory_space<vmem>>, vector<1x16x256xf32>
      tpu.vector_store %arg6[%c0_21, %c0_22, %c0_23], %15 {strides = array<i32>} : memref<1x16x256xf32, #tpu.memory_space<vmem>>, vector<1x16x256xf32>,
    } else {
    }
    %c0 = arith.constant 0 : index
    %c0_1 = arith.constant 0 : index
    %c0_2 = arith.constant 0 : index
    %3 = vector.load %arg2[%c0, %c0_1, %c0_2] : memref<1x16x256xf32, #tpu.memory_space<vmem>>, vector<1x16x256xf32>
    %c0_3 = arith.constant 0 : index
    %c0_4 = arith.constant 0 : index
    %c0_5 = arith.constant 0 : index
    %4 = vector.load %arg5[%c0_3, %c0_4, %c0_5] : memref<1x16x256xf32, #tpu.memory_space<vmem>>, vector<1x16x256xf32>
    %5 = arith.maximumf %4, %3 : vector<1x16x256xf32>
    %c0_6 = arith.constant 0 : index
    %c0_7 = arith.constant 0 : index
    %c0_8 = arith.constant 0 : index
    %6 = vector.load %arg5[%c0_6, %c0_7, %c0_8] : memref<1x16x256xf32, #tpu.memory_space<vmem>>, vector<1x16x256xf32>
    tpu.vector_store %arg5[%c0_6, %c0_7, %c0_8], %5 {strides = array<i32>} : memref<1x16x256xf32, #tpu.memory_space<vmem>>, vector<1x16x256xf32>,
    %c0_9 = arith.constant 0 : index
    %c0_10 = arith.constant 0 : index
    %c0_11 = arith.constant 0 : index
    %7 = vector.load %arg6[%c0_9, %c0_10, %c0_11] : memref<1x16x256xf32, #tpu.memory_space<vmem>>, vector<1x16x256xf32>
    %8 = arith.addf %7, %3 : vector<1x16x256xf32>
    %c0_12 = arith.constant 0 : index
    %c0_13 = arith.constant 0 : index
    %c0_14 = arith.constant 0 : index
    %9 = vector.load %arg6[%c0_12, %c0_13, %c0_14] : memref<1x16x256xf32, #tpu.memory_space<vmem>>, vector<1x16x256xf32>
    tpu.vector_store %arg6[%c0_12, %c0_13, %c0_14], %8 {strides = array<i32>} : memref<1x16x256xf32, #tpu.memory_space<vmem>>, vector<1x16x256xf32>,
    %c0_i32_15 = arith.constant 0 : i32
    %10 = arith.cmpi eq, %arg1, %c0_i32_15 : i32
    %11 = arith.extui %10 : i1 to i32
    %c0_i32_16 = arith.constant 0 : i32
    %12 = arith.cmpi ne, %11, %c0_i32_16 : i32
    scf.if %12 {
      %c0_17 = arith.constant 0 : index
      %c0_18 = arith.constant 0 : index
      %c0_19 = arith.constant 0 : index
      %13 = vector.load %arg5[%c0_17, %c0_18, %c0_19] : memref<1x16x256xf32, #tpu.memory_space<vmem>>, vector<1x16x256xf32>
      %cst = arith.constant dense<0xFF800000> : vector<1x16xf32>
      %14 = vector.multi_reduction <maximumf>, %13, %cst [2] : vector<1x16x256xf32> to vector<1x16xf32>
      %c0_20 = arith.constant 0 : index
      %c0_21 = arith.constant 0 : index
      %c0_22 = arith.constant 0 : index
      %15 = vector.load %arg6[%c0_20, %c0_21, %c0_22] : memref<1x16x256xf32, #tpu.memory_space<vmem>>, vector<1x16x256xf32>
      %cst_23 = arith.constant dense<0.000000e+00> : vector<1x16xf32>
      %16 = vector.multi_reduction <add>, %15, %cst_23 [2] : vector<1x16x256xf32> to vector<1x16xf32>
      %cst_24 = arith.constant 3.906250e-03 : f32
      %17 = vector.broadcast %cst_24 : f32 to vector<1x16xf32>
      %18 = arith.mulf %16, %17 : vector<1x16xf32>
      %19 = vector.shape_cast %14 : vector<1x16xf32> to vector<1x1x16xf32>
      %c0_25 = arith.constant 0 : index
      %c0_26 = arith.constant 0 : index
      %c0_27 = arith.constant 0 : index
      %20 = vector.load %arg3[%c0_25, %c0_26, %c0_27] : memref<1x1x16xf32, #tpu.memory_space<vmem>>, vector<1x1x16xf32>
      tpu.vector_store %arg3[%c0_25, %c0_26, %c0_27], %19 {strides = array<i32>} : memref<1x1x16xf32, #tpu.memory_space<vmem>>, vector<1x1x16xf32>,
      %21 = vector.shape_cast %18 : vector<1x16xf32> to vector<1x1x16xf32>
      %c0_28 = arith.constant 0 : index
      %c0_29 = arith.constant 0 : index
      %c0_30 = arith.constant 0 : index
      %22 = vector.load %arg4[%c0_28, %c0_29, %c0_30] : memref<1x1x16xf32, #tpu.memory_space<vmem>>, vector<1x1x16xf32>
      tpu.vector_store %arg4[%c0_28, %c0_29, %c0_30], %21 {strides = array<i32>} : memref<1x1x16xf32, #tpu.memory_space<vmem>>, vector<1x1x16xf32>,
    } else {
    }
    return
  }
  func.func @transform_0(%arg0: i32, %arg1: i32) -> (i32, i32, i32) {
    %c0_i32 = arith.constant 0 : i32
    %c0_i32_0 = arith.constant 0 : i32
    return %arg0, %c0_i32, %arg1 : i32, i32, i32
  }
  func.func @transform_1(%arg0: i32, %arg1: i32) -> (i32, i32, i32) {
    %c0_i32 = arith.constant 0 : i32
    %c0_i32_0 = arith.constant 0 : i32
    %c0_i32_1 = arith.constant 0 : i32
    return %arg0, %c0_i32, %c0_i32_0 : i32, i32, i32
  }
  func.func @transform_2(%arg0: i32, %arg1: i32) -> (i32, i32, i32) {
    %c0_i32 = arith.constant 0 : i32
    %c0_i32_0 = arith.constant 0 : i32
    %c0_i32_1 = arith.constant 0 : i32
    return %arg0, %c0_i32, %c0_i32_0 : i32, i32, i32
  }
}

</mosaic_0001>

<llo_original>
// kernel: tpu_custom_call.1
$region0: #{tpu_custom_call.1}
  #allocation0 [shape = 'u32[]', space=smem, size = 0x4, offset = 0x4, fixed_abs, tag = 'smem constant byte address 0x4 - core index']
  #allocation1 [shape = 'u32[144,128]{1,0:T(1,128)}', space=vmem, size = 0x12000, scoped, tag = 'internal scratch']
  #allocation2 [shape = 'f32[1,16,256]{2,1,0:T(8,128)}', space=vmem, size = 0x4000, scoped, tag = 'scratch operand']
  #allocation3 [shape = 'f32[1,16,256]{2,1,0:T(8,128)}', space=vmem, size = 0x4000, scoped, tag = 'scratch operand']
  %s0 = inlined_call_operand.hbm [shape: f32[2,16,256], index: 0, kind: input, shape index: {}]
  %s1 = inlined_call_operand.hbm [shape: f32[2,1,16], index: 1, kind: output, shape index: {0}]
  %s2 = inlined_call_operand.hbm [shape: f32[2,1,16], index: 2, kind: output, shape index: {1}]
  %3 = xla_tuple %s1, %s2
  %s4 = sld [smem:[#allocation0]]
  $region57: #{tpu_custom_call.1} parent=0
    _
  %s6 = ssub.s32 1, %s4
  %s7 = scalar_select 0, %s6, %s4
  $region1: #{tpu_custom_call.1} parent=0
    #allocation4 [shape = 'u8[32768]{0}', space=vmem, size = 0x8000, scoped, tag = 'input window, operand 0']
    #allocation5 [shape = 's32[2]{0}', space=sflag, size = 0x8, scoped, tag = 'scoped memory for tpu_custom_call.1']
    #allocation6 [shape = 's32[2]{0}', space=sflag, size = 0x8, scoped, tag = 'scoped memory for tpu_custom_call.1']
    #allocation7 [shape = 'u8[1024]{0}', space=vmem, size = 0x400, scoped, tag = 'output window, operand 0']
    #allocation8 [shape = 'u8[1024]{0}', space=vmem, size = 0x400, scoped, tag = 'output window, operand 1']
    #allocation9 [shape = 's32[2]{0}', space=sflag, size = 0x8, scoped, tag = 'scoped memory for tpu_custom_call.1']
    %8 = vsyncpa [#allocation5], 0
    %s9 = scalar_lea.sflag [#allocation5], 1
    %10 = vsyncpa %s9, 0
    %11 = vsyncpa [#allocation6], 0
    %s12 = scalar_lea.sflag [#allocation6], 1
    %13 = vsyncpa %s12, 0
    %14 = vsyncpa [#allocation9], 0
    %s15 = scalar_lea.sflag [#allocation9], 1
    %16 = vsyncpa %s15, 0
    loop: start=0, step=1, limit=4
    $region2: #{tpu_custom_call.1} parent=1 // loop_pre_header
      _
    $region3: #{tpu_custom_call.1} parent=1 // loop_header
      %s18 = sphi 0, %s22
      %p19 = scmp.ge.s32.totalorder %s18, 4
      %s25 = sphi 0, %s37
      %s26 = sphi 0, %s33
      %s27 = sphi 0, %s25
      %s28 = sphi 0, %s26
      %s29 = sphi 0, %s27
      %s30 = sphi 0, %s28
      %s42 = sphi 0, %s44
      %s45 = sphi 0, %s42
      %s46 = sphi 0, %s45
      %s62 = sphi 0, %s46
      %s68 = sphi 0, %s70
      %s71 = sphi 0, %s68
      %s72 = sphi 0, %s71
      %s88 = sphi 0, %s72
      %s94 = sphi 0, %s96
      %s97 = sphi 0, %s94
      %s98 = sphi 0, %s97
      %s114 = sphi 0, %s98
    $region4: #{tpu_custom_call.1} parent=1 // loop_header_branch
      %21 = sbr.rel (%p19) target = $region8
    $region5: #{tpu_custom_call.1} parent=1 // loop_body
      %s23 = ssub.s32 %s18, 1
      %s24 = ssub.s32 %s18, 2
      %s31 = sadd.s32 1, %s26
      %p32 = scmp.ge.s32.totalorder %s31, 1
      %s33 = scalar_select %p32, 0, %s31
      %s34 = sadd.s32 1, %s25
      %s35 = scalar_select %p32, %s34, %s25
      %p36 = scmp.ge.s32.totalorder %s35, 2
      %s37 = scalar_select %p36, 0, %s35
      %s38 = ssub.s32 %s25, %s37
      %s39 = ssub.s32 %s26, %s33
      %s40 = sor.u32 %s38, %s39
      %p41 = scmp.eq.s32.totalorder %s40, 0
      %s43 = sadd.s32 %s42, 1
      %s44 = scalar_select %p41, %s42, %s43
      %p47 = pneg %p41
      %p48 = scmp.eq.s32.totalorder %s18, 1
      %p49 = por %p47, %p48
      %p50 = scmp.ne.s32.totalorder %s42, %s45
      %p51 = scmp.eq.s32.totalorder %s18, 0
      %p52 = por %p50, %p51
      %p53 = scmp.ne.s32.totalorder %s42, %s45
      %p54 = scmp.eq.s32.totalorder %s23, 1
      %p55 = por %p53, %p54
      %p56 = scmp.ne.s32.totalorder %s45, %s46
      %p57 = scmp.eq.s32.totalorder %s23, 0
      %p58 = por %p56, %p57
      %p59 = scmp.ne.s32.totalorder %s45, %s46
      %p60 = scmp.eq.s32.totalorder %s24, 1
      %p61 = por %p59, %p60
      %p63 = scmp.ne.s32.totalorder %s46, %s62
      %p64 = scmp.eq.s32.totalorder %s24, 0
      %p65 = por %p63, %p64
      %s66 = ssub.s32 %s25, %s37
      %p67 = scmp.eq.s32.totalorder %s66, 0
      %s69 = sadd.s32 %s68, 1
      %s70 = scalar_select %p67, %s68, %s69
      %p73 = pneg %p67
      %p74 = scmp.eq.s32.totalorder %s18, 1
      %p75 = por %p73, %p74
      %p76 = scmp.ne.s32.totalorder %s68, %s71
      %p77 = scmp.eq.s32.totalorder %s18, 0
      %p78 = por %p76, %p77
      %p79 = scmp.ne.s32.totalorder %s68, %s71
      %p80 = scmp.eq.s32.totalorder %s23, 1
      %p81 = por %p79, %p80
      %p82 = scmp.ne.s32.totalorder %s71, %s72
      %p83 = scmp.eq.s32.totalorder %s23, 0
      %p84 = por %p82, %p83
      %p85 = scmp.ne.s32.totalorder %s71, %s72
      %p86 = scmp.eq.s32.totalorder %s24, 1
      %p87 = por %p85, %p86
      %p89 = scmp.ne.s32.totalorder %s72, %s88
      %p90 = scmp.eq.s32.totalorder %s24, 0
      %p91 = por %p89, %p90
      %s92 = ssub.s32 %s25, %s37
      %p93 = scmp.eq.s32.totalorder %s92, 0
      %s95 = sadd.s32 %s94, 1
      %s96 = scalar_select %p93, %s94, %s95
      %p99 = pneg %p93
      %p100 = scmp.eq.s32.totalorder %s18, 1
      %p101 = por %p99, %p100
      %p102 = scmp.ne.s32.totalorder %s94, %s97
      %p103 = scmp.eq.s32.totalorder %s18, 0
      %p104 = por %p102, %p103
      %p105 = scmp.ne.s32.totalorder %s94, %s97
      %p106 = scmp.eq.s32.totalorder %s23, 1
      %p107 = por %p105, %p106
      %p108 = scmp.ne.s32.totalorder %s97, %s98
      %p109 = scmp.eq.s32.totalorder %s23, 0
      %p110 = por %p108, %p109
      %p111 = scmp.ne.s32.totalorder %s97, %s98
      %p112 = scmp.eq.s32.totalorder %s24, 1
      %p113 = por %p111, %p112
      %p115 = scmp.ne.s32.totalorder %s98, %s114
      %p116 = scmp.eq.s32.totalorder %s24, 0
      %p117 = por %p115, %p116
      %p118 = scmp.le.s32.totalorder 1, %s18
      %p119 = scmp.lt.s32.totalorder %s18, 3
      %p120 = pnand %p118, %p119
      %p121 = pneg %p120
      // Predicated region
      $region9: #{tpu_custom_call.1} parent=5 // pred_check
        _
      $region10: #{tpu_custom_call.1} parent=5 // pred_check_branch
        %123 = sbr.rel (%p120) target = $region12
      $region11: #{tpu_custom_call.1} parent=5 // pred_region
        %s124 = ssub.s32 %s18, 1
      $region12: #{tpu_custom_call.1} parent=5 // pred_fallthru
        _
      %p125 = scmp.lt.s32.totalorder %s18, 2
      // Predicated region
      $region13: #{tpu_custom_call.1} parent=5 // pred_check
        %p126 = pneg %p125
      $region14: #{tpu_custom_call.1} parent=5 // pred_check_branch
        %128 = sbr.rel (%p126) target = $region16
      $region15: #{tpu_custom_call.1} parent=5 // pred_region
        // Predicated region
        $region17: #{tpu_custom_call.1} parent=15 // pred_check
          %p129 = pneg %p52
        $region18: #{tpu_custom_call.1} parent=15 // pred_check_branch
          %131 = sbr.rel (%p129) target = $region20
        $region19: #{tpu_custom_call.1} parent=15 // pred_region
          %s132 = sand.u32 %s42, 1
          %s133 = scalar_lea.sflag [#allocation5], %s132
          %s134 = sand.u32 %s42, 1
          %s135 = smul.addr %s134, 32
          %s136 = scalar_lea.vmem [#allocation4], %s135
          %s137 = smul.u32 2, %s26
          %s139 = ssub.s32 512, 512
          %140 = vsyncadd %s133, %s139
          %s141 = smul.addr %s25, 4
          %s142 = sadd.s32 %s137, %s141
          %s143 = smul.addr %s142, 128
          %s144 = scalar_lea.hbm %s0, %s143
          %s145 = sshll.u32 %s136, 4
          %s146 = int_to_ptr.vmem [resolvable:$true] %s145
          %151 = dma.hbm_to_vmem [thread:$0]  %s144, 512, %s146, %s133, 256, 256, 16
        $region20: #{tpu_custom_call.1} parent=15 // pred_fallthru
          _
      $region16: #{tpu_custom_call.1} parent=5 // pred_fallthru
        _
      %p152 = scmp.le.s32.totalorder 1, %s18
      %p153 = scmp.lt.s32.totalorder %s18, 3
      %p154 = pnand %p152, %p153
      %p155 = pneg %p154
      // Predicated region
      $region21: #{tpu_custom_call.1} parent=5 // pred_check
        _
      $region22: #{tpu_custom_call.1} parent=5 // pred_check_branch
        %157 = sbr.rel (%p154) target = $region24
      $region23: #{tpu_custom_call.1} parent=5 // pred_region
        %s158 = ssub.s32 %s18, 1
        %s159 = sand.u32 %s45, 1
        %s160 = scalar_lea.sflag [#allocation5], %s159
        %s161 = sand.u32 %s45, 1
        %s162 = smul.addr %s161, 32
        %s163 = scalar_lea.vmem [#allocation4], %s162
        // Predicated region
        $region25: #{tpu_custom_call.1} parent=23 // pred_check
          %p164 = pneg %p58
        $region26: #{tpu_custom_call.1} parent=23 // pred_check_branch
          %166 = sbr.rel (%p164) target = $region28
        $region27: #{tpu_custom_call.1} parent=23 // pred_region
          %167 = dma.done %s160, 512
        $region28: #{tpu_custom_call.1} parent=23 // pred_fallthru
          _
        %s168 = sand.u32 %s45, 1
        %s169 = scalar_lea.sflag [#allocation5], %s168
        %s170 = sand.u32 %s45, 1
        %s171 = smul.addr %s170, 32
        %s172 = scalar_lea.vmem [#allocation4], %s171
        %p173 = pneg %p58
        %p174 = pneg %p55
        %p175 = pneg %p84
        %p176 = pneg %p81
        %s177 = sand.u32 %s71, 1
        %s178 = scalar_lea.sflag [#allocation6], %s177
        %s179 = sand.u32 %s71, 1
        %s180 = scalar_lea.vmem [#allocation7], %s179
        %p181 = pneg %p110
        %p182 = pneg %p107
        %s183 = sand.u32 %s97, 1
        %s184 = scalar_lea.sflag [#allocation9], %s183
        %s185 = sand.u32 %s97, 1
        %s186 = scalar_lea.vmem [#allocation8], %s185
        %s187 = smul.u32 2, %s28
        %p188 = scmp.eq.s32.totalorder %s28, 0
        // Predicated region
        $region29: #{tpu_custom_call.1} parent=23 // pred_check
          %p189 = pneg %p188
        $region30: #{tpu_custom_call.1} parent=23 // pred_check_branch
          %191 = sbr.rel (%p189) target = $region32
        $region31: #{tpu_custom_call.1} parent=23 // pred_region
          %192 = vst [vmem:[#allocation2] sm:$0xff] -inf
          %193 = vst [vmem:[#allocation2 + $0x8] sm:$0xff] -inf
          %194 = vst [vmem:[#allocation2 + $0x10] sm:$0xff] -inf
          %195 = vst [vmem:[#allocation2 + $0x18] sm:$0xff] -inf
          %196 = vst [vmem:[#allocation3] sm:$0xff] 0.0
          %197 = vst [vmem:[#allocation3 + $0x8] sm:$0xff] 0.0
          %198 = vst [vmem:[#allocation3 + $0x10] sm:$0xff] 0.0
          %199 = vst [vmem:[#allocation3 + $0x18] sm:$0xff] 0.0
        $region32: #{tpu_custom_call.1} parent=23 // pred_fallthru
          _
        %v200 = vld [vmem:[%s163] sm:$0xff]
        %v201 = vld [vmem:[%s163 + $0x8] sm:$0xff]
        %v202 = vld [vmem:[%s163 + $0x10] sm:$0xff]
        %v203 = vld [vmem:[%s163 + $0x18] sm:$0xff]
        %v204 = vld [vmem:[#allocation2] sm:$0xff]
        %v205 = vld [vmem:[#allocation2 + $0x8] sm:$0xff]
        %v206 = vld [vmem:[#allocation2 + $0x10] sm:$0xff]
        %v207 = vld [vmem:[#allocation2 + $0x18] sm:$0xff]
        %v208 = vmax.f32 %v204, %v200
        %v209 = vmax.f32 %v205, %v201
        %v210 = vmax.f32 %v206, %v202
        %v211 = vmax.f32 %v207, %v203
        %212 = vst [vmem:[#allocation2] sm:$0xff] %v208
        %213 = vst [vmem:[#allocation2 + $0x8] sm:$0xff] %v209
        %214 = vst [vmem:[#allocation2 + $0x10] sm:$0xff] %v210
        %215 = vst [vmem:[#allocation2 + $0x18] sm:$0xff] %v211
        %v216 = vld [vmem:[#allocation3] sm:$0xff]
        %v217 = vld [vmem:[#allocation3 + $0x8] sm:$0xff]
        %v218 = vld [vmem:[#allocation3 + $0x10] sm:$0xff]
        %v219 = vld [vmem:[#allocation3 + $0x18] sm:$0xff]
        %v220 = vadd.f32 %v216, %v200
        %v221 = vadd.f32 %v217, %v201
        %v222 = vadd.f32 %v218, %v202
        %v223 = vadd.f32 %v219, %v203
        %224 = vst [vmem:[#allocation3] sm:$0xff] %v220
        %225 = vst [vmem:[#allocation3 + $0x8] sm:$0xff] %v221
        %226 = vst [vmem:[#allocation3 + $0x10] sm:$0xff] %v222
        %227 = vst [vmem:[#allocation3 + $0x18] sm:$0xff] %v223
        // Predicated region
        $region33: #{tpu_custom_call.1} parent=23 // pred_check
          %p228 = pneg %p188
        $region34: #{tpu_custom_call.1} parent=23 // pred_check_branch
          %230 = sbr.rel (%p228) target = $region36
        $region35: #{tpu_custom_call.1} parent=23 // pred_region
          %v231 = vld [vmem:[#allocation2] sm:$0xff]
          %v232 = vld [vmem:[#allocation2 + $0x8] sm:$0xff]
          %v233 = vld [vmem:[#allocation2 + $0x10] sm:$0xff]
          %v234 = vld [vmem:[#allocation2 + $0x18] sm:$0xff]
          %v235 = vmax.f32 %v231, %v232
          %236 = vmax.xlane.f32.xlu0 %v235
          %v237 = vpop.xlane.xlu0 %236
          %v238 = vmax.f32 %v233, %v234
          %239 = vmax.xlane.f32.xlu0 %v238
          %v240 = vpop.xlane.xlu0 %239
          %v241 = vld [vmem:[#allocation3] sm:$0xff]
          %v242 = vld [vmem:[#allocation3 + $0x8] sm:$0xff]
          %v243 = vld [vmem:[#allocation3 + $0x10] sm:$0xff]
          %v244 = vld [vmem:[#allocation3 + $0x18] sm:$0xff]
          %v245 = vadd.f32 %v241, %v242
          %246 = vadd.xlane.f32.xlu0 %v245
          %v247 = vpop.xlane.xlu0 %246
          %v248 = vadd.f32 %v243, %v244
          %249 = vadd.xlane.f32.xlu0 %v248
          %v250 = vpop.xlane.xlu0 %249
          %v251 = vmul.f32 %v247, 0.00390625
          %v252 = vmul.f32 %v250, 0.00390625
          %v255 = vlaneseq
          %v256 = vand.u32 %v255, 127
          %v257 = vlaneseq
          %v258 = vshrl.u32 %v257, 7
          %v259 = vsub.s32 %v256, %v258
          %v260 = vrot.slane %v237, %v259
          %v261 = vadd.s32 %v256, 4294967288
          %v262 = vlaneseq
          %v263 = vshrl.u32 %v262, 7
          %v264 = vsub.s32 %v261, %v263
          %v265 = vrot.slane %v240, %v264
          %vm266 = vcmask 130112
          %v267 = vsel %vm266, %v265, %v260
          %vm269 = vcmask 122880
          %270 = vst.msk [vmem:[%s180] sm:$0x1] %vm269, %v267
          %v273 = vlaneseq
          %v274 = vshrl.u32 %v273, 7
          %v275 = vsub.s32 %v256, %v274
          %v276 = vrot.slane %v251, %v275
          %v277 = vlaneseq
          %v278 = vshrl.u32 %v277, 7
          %v279 = vsub.s32 %v261, %v278
          %v280 = vrot.slane %v252, %v279
          %v281 = vsel %vm266, %v280, %v276
          %283 = vst.msk [vmem:[%s186] sm:$0x1] %vm269, %v281
        $region36: #{tpu_custom_call.1} parent=23 // pred_fallthru
          _
        %s284 = sand.u32 %s71, 1
        %s285 = scalar_lea.sflag [#allocation6], %s284
        %s286 = sand.u32 %s71, 1
        %s287 = scalar_lea.vmem [#allocation7], %s286
        %s288 = sand.u32 %s97, 1
        %s289 = scalar_lea.sflag [#allocation9], %s288
        %s290 = sand.u32 %s97, 1
        %s291 = scalar_lea.vmem [#allocation8], %s290
        // Predicated region
        $region37: #{tpu_custom_call.1} parent=23 // pred_check
          %p292 = pneg %p81
        $region38: #{tpu_custom_call.1} parent=23 // pred_check_branch
          %294 = sbr.rel (%p292) target = $region40
        $region39: #{tpu_custom_call.1} parent=23 // pred_region
          %s296 = ssub.s32 16, 16
          %297 = vsyncadd %s285, %s296
          %s298 = smul.addr %s27, 16
          %s299 = scalar_lea.hbm %s1, %s298
          %s301 = sshll.u32 %s287, 4
          %s302 = int_to_ptr.vmem [resolvable:$true] %s301
          %304 = dma.vmem_to_hbm [thread:$0]  %s302, 16, %s299, %s285
        $region40: #{tpu_custom_call.1} parent=23 // pred_fallthru
          _
        // Predicated region
        $region41: #{tpu_custom_call.1} parent=23 // pred_check
          %p305 = pneg %p107
        $region42: #{tpu_custom_call.1} parent=23 // pred_check_branch
          %307 = sbr.rel (%p305) target = $region44
        $region43: #{tpu_custom_call.1} parent=23 // pred_region
          %s309 = ssub.s32 16, 16
          %310 = vsyncadd %s289, %s309
          %s311 = smul.addr %s27, 16
          %s312 = scalar_lea.hbm %s2, %s311
          %s314 = sshll.u32 %s291, 4
          %s315 = int_to_ptr.vmem [resolvable:$true] %s314
          %317 = dma.vmem_to_hbm [thread:$0]  %s315, 16, %s312, %s289
        $region44: #{tpu_custom_call.1} parent=23 // pred_fallthru
          _
      $region24: #{tpu_custom_call.1} parent=5 // pred_fallthru
        _
      %p318 = scmp.le.s32.totalorder 2, %s18
      // Predicated region
      $region45: #{tpu_custom_call.1} parent=5 // pred_check
        %p319 = pneg %p318
      $region46: #{tpu_custom_call.1} parent=5 // pred_check_branch
        %321 = sbr.rel (%p319) target = $region48
      $region47: #{tpu_custom_call.1} parent=5 // pred_region
        %s322 = ssub.s32 %s18, 2
        // Predicated region
        $region49: #{tpu_custom_call.1} parent=47 // pred_check
          %p323 = pneg %p87
        $region50: #{tpu_custom_call.1} parent=47 // pred_check_branch
          %325 = sbr.rel (%p323) target = $region52
        $region51: #{tpu_custom_call.1} parent=47 // pred_region
          %s326 = sand.u32 %s72, 1
          %s327 = scalar_lea.sflag [#allocation6], %s326
          %s328 = sand.u32 %s72, 1
          %s329 = scalar_lea.vmem [#allocation7], %s328
          %330 = dma.done %s327, 16
        $region52: #{tpu_custom_call.1} parent=47 // pred_fallthru
          _
        // Predicated region
        $region53: #{tpu_custom_call.1} parent=47 // pred_check
          %p331 = pneg %p113
        $region54: #{tpu_custom_call.1} parent=47 // pred_check_branch
          %333 = sbr.rel (%p331) target = $region56
        $region55: #{tpu_custom_call.1} parent=47 // pred_region
          %s334 = sand.u32 %s98, 1
          %s335 = scalar_lea.sflag [#allocation9], %s334
          %s336 = sand.u32 %s98, 1
          %s337 = scalar_lea.vmem [#allocation8], %s336
          %338 = dma.done %s335, 16
        $region56: #{tpu_custom_call.1} parent=47 // pred_fallthru
          _
      $region48: #{tpu_custom_call.1} parent=5 // pred_fallthru
        _
    $region6: #{tpu_custom_call.1} parent=1 // loop_footer
      %s22 = sadd.s32 1, %s18
    $region7: #{tpu_custom_call.1} parent=1 // loop_footer_branch
      %17 = sbr.rel target = $region3
    $region8: #{tpu_custom_call.1} parent=1 // loop_exit
      _
    %339 = vsyncpa [#allocation5], 1
    %s340 = scalar_lea.sflag [#allocation5], 1
    %341 = vsyncpa %s340, 1
    %342 = vsyncpa [#allocation6], 1
    %s343 = scalar_lea.sflag [#allocation6], 1
    %344 = vsyncpa %s343, 1
    %345 = vsyncpa [#allocation9], 1
    %s346 = scalar_lea.sflag [#allocation9], 1
    %347 = vsyncpa %s346, 1

</llo_original>
